<compile_context>
chip_gen: v6e
topology: v6e:2x2x1
jax: 0.10.0
libtpu: 0.0.40
codegen_flags: <defaults>
</compile_context>

<pallas_src>
import jax
import jax.numpy as jnp
from jax import lax
from jax.experimental import pallas as pl
from jax.experimental.pallas import tpu as pltpu


# ---------------------------------------------------------------------------
# Minimal stand-in for protsupport's PackedTensor: a holder with a .tensor attr.
# ---------------------------------------------------------------------------
class PackedTensor:
    def __init__(self, tensor):
        self.tensor = tensor


def _round_up(x, m):
    return (x + m - 1) // m * m


def _choose_batch_tile(B):
    """Batch tile: multiple of 16 sublanes (bf16 packing), <=128. When B is large
    enough, split into >=2 tiles so the 'parallel' grid axis can shard across
    v7x's two TensorCores."""
    B16 = _round_up(max(B, 1), 16)
    tb = min(128, B16)
    if B16 <= tb and B16 >= 32:
        tb = _round_up(B16 // 2, 16)
    B_pad = _round_up(B16, tb)
    return tb, B_pad


def _choose_d_tiling(D, hidden, *, max_tk=2048, single_step_bytes=8 * 1024 * 1024):
    """Pick (D_pad, tk). Collapse to a single D step (tk == D_pad) whenever the
    double-buffered x + W1 tiles comfortably fit in VMEM; else tile with big tk."""
    D128 = _round_up(max(D, 1), 128)
    per_step = (128 + hidden) * D128 * 2          # bf16 bytes, tb up to 128
    if 2 * per_step <= single_step_bytes:
        return D128, D128
    tk = min(max_tk, D128)
    D_pad = _round_up(D128, tk)
    return D_pad, tk


def _vmem_limit(tb, tk, hidden, multi_step):
    """Budget derived from tile shapes (double-buffered bf16 input tiles, f32 output
    slab, small bias/weight-row blocks, accumulator scratch). Kept well under v7x's
    64 MiB physical VMEM."""
    need = 2 * (tb * tk * 2 + hidden * tk * 2)    # x tile + W1 tile, double-buffered
    need += 2 * (tb * 128 * 4)                    # output slab, double-buffered
    need += 2 * (2 * hidden * 4 + 4)              # b1, w2 row, b2
    if multi_step:
        need += tb * hidden * 4                   # f32 accumulator scratch
    return int(min(48 * 1024 * 1024, max(4 * 1024 * 1024, 2 * need)))


# ---------------------------------------------------------------------------
# Kernels.
#   Single-step D (the common small-D case): one matmul + epilogue, no scratch.
#   Tiled D: f32 VMEM accumulator with pl.when init/finalize over the reduction axis.
# Both use the trans-b contraction directly (no in-kernel transpose of W1).
# ---------------------------------------------------------------------------
def _matmul_xt_w1t(x_tile, w1t_tile):
    # x_tile: [tb, tk] bf16, w1t_tile: [hidden, tk] bf16  ->  [tb, hidden] f32
    return lax.dot_general(
        x_tile, w1t_tile,
        dimension_numbers=(((1,), (1,)), ((), ())),
        preferred_element_type=jnp.float32,
    )


def _epilogue(h, b1, w2_row, b2, out_shape):
    h = h + b1                                     # [tb, H] f32
    h = jnp.where(h > 0, h, 0.2 * h)               # LeakyReLU(0.2), f32 on VPU
    # Second linear (K=hidden, N=1) as a lane reduction instead of a padded MXU matmul.
    o = jnp.sum(h * w2_row, axis=-1, keepdims=True) + b2    # [tb, 1]
    # Lane-dense store: fill the full 128-wide output slab (unmasked vst);
    # the wrapper slices out column 0.
    return jnp.broadcast_to(o, out_shape)


def _ddp_net_kernel_single(x_ref, w1t_ref, b1_ref, w2_ref, b2_ref, o_ref):
    h = _matmul_xt_w1t(x_ref[...], w1t_ref[...])
    o_ref[...] = _epilogue(h, b1_ref[...], w2_ref[...], b2_ref[...], o_ref.shape)


def _ddp_net_kernel_tiled(x_ref, w1t_ref, b1_ref, w2_ref, b2_ref, o_ref, acc_ref):
    k = pl.program_id(1)

    @pl.when(k == 0)
    def _():
        acc_ref[...] = jnp.zeros_like(acc_ref)

    acc_ref[...] += _matmul_xt_w1t(x_ref[...], w1t_ref[...])

    @pl.when(k == pl.num_programs(1) - 1)
    def _():
        o_ref[...] = _epilogue(acc_ref[...], b1_ref[...], w2_ref[...], b2_ref[...],
                               o_ref.shape)


def _net_forward(x_flat, w1_bf16, b1, w2_row, b2, *, tk):
    """x_flat: [B, D]; w1_bf16: [hidden, D_pad] bf16, lane-dense, zero-padded.
    Returns [B, 1] f32."""
    B, D = x_flat.shape
    hidden, D_pad = w1_bf16.shape

    tb, B_pad = _choose_batch_tile(B)

    # Prepare x in one pass: bf16 cast first, then a single bf16 zero-pad (skipped
    # when already tile-aligned).
    x_bf16 = x_flat.astype(jnp.bfloat16)
    if (B_pad != B) or (D_pad != D):
        x_bf16 = jnp.pad(x_bf16, ((0, B_pad - B), (0, D_pad - D)))

    multi_step = tk < D_pad
    vmem_limit = _vmem_limit(tb, tk, hidden, multi_step)

    if not multi_step:
        # Single D step: grid over batch tiles only. W1's block index is constant, so
        # it stays resident in VMEM across batch tiles (no re-streaming).
        out = pl.pallas_call(
            _ddp_net_kernel_single,
            out_shape=jax.ShapeDtypeStruct((B_pad, 128), jnp.float32),
            grid_spec=pltpu.PrefetchScalarGridSpec(
                num_scalar_prefetch=0,
                grid=(B_pad // tb,),
                in_specs=[
                    pl.BlockSpec((tb, D_pad), lambda b: (b, 0)),        # x (bf16)
                    pl.BlockSpec((hidden, D_pad), lambda b: (0, 0)),    # W1^T (bf16)
                    pl.BlockSpec((1, hidden), lambda b: (0, 0)),        # b1 (f32)
                    pl.BlockSpec((1, hidden), lambda b: (0, 0)),        # w2 row (f32)
                    pl.BlockSpec((1, 1), lambda b: (0, 0)),             # b2 (f32)
                ],
                out_specs=pl.BlockSpec((tb, 128), lambda b: (b, 0)),
            ),
            compiler_params=pltpu.CompilerParams(
                dimension_semantics=("parallel",),
                vmem_limit_bytes=vmem_limit,
            ),
        )(x_bf16, w1_bf16, b1, w2_row, b2)
    else:
        # Tiled reduction over D (reduction axis last, "arbitrary"); batch axis parallel.
        out = pl.pallas_call(
            _ddp_net_kernel_tiled,
            out_shape=jax.ShapeDtypeStruct((B_pad, 128), jnp.float32),
            grid_spec=pltpu.PrefetchScalarGridSpec(
                num_scalar_prefetch=0,
                grid=(B_pad // tb, D_pad // tk),
                in_specs=[
                    pl.BlockSpec((tb, tk), lambda b, k: (b, k)),        # x (bf16)
                    pl.BlockSpec((hidden, tk), lambda b, k: (0, k)),    # W1^T (bf16)
                    pl.BlockSpec((1, hidden), lambda b, k: (0, 0)),     # b1 (f32)
                    pl.BlockSpec((1, hidden), lambda b, k: (0, 0)),     # w2 row (f32)
                    pl.BlockSpec((1, 1), lambda b, k: (0, 0)),          # b2 (f32)
                ],
                out_specs=pl.BlockSpec((tb, 128), lambda b, k: (b, 0)),
                scratch_shapes=[pltpu.VMEM((tb, hidden), jnp.float32)],
            ),
            compiler_params=pltpu.CompilerParams(
                dimension_semantics=("parallel", "arbitrary"),
                vmem_limit_bytes=vmem_limit,
            ),
        )(x_bf16, w1_bf16, b1, w2_row, b2)

    return out[:B, :1]


# ---------------------------------------------------------------------------
# DDP wrapper: reproduces forward() semantics — unwrap PackedTensor args,
# then call the wrapped net on the raw tensors.
# ---------------------------------------------------------------------------
class DDP:
    def __init__(self, net):
        self.net = net

    def sample(self, *args, **kwargs):
        return self.net.sample(*args, **kwargs)

    def __call__(self, *args):
        inputs = []
        for arg in args:
            if isinstance(arg, PackedTensor):
                inputs.append(arg.tensor)
            else:
                inputs.append(arg)
        return self.net(*inputs)


class SimpleDistanceDiscriminator:
    """Wrapped net: flatten NCHW distance map -> Linear(D, Hid) -> LeakyReLU(0.2) -> Linear(Hid, 1)."""

    def __init__(self, in_features, hidden, key):
        k1, k2 = jax.random.split(key)
        self.in_features = in_features
        self.hidden = hidden
        # Deterministic synthetic init (no checkpoint loading).
        # W1 kept pre-transposed / lane-dense: [hidden, D] with D on the lane axis.
        self.w1_t = (jax.random.normal(k1, (hidden, in_features), jnp.float32)
                     * (1.0 / jnp.sqrt(in_features)))
        self.b1 = jnp.zeros((1, hidden), jnp.float32)
        # W2 stored as a [1, hidden] row so the second linear is a lane reduction.
        self.w2_row = (jax.random.normal(k2, (1, hidden), jnp.float32)
                       * (1.0 / jnp.sqrt(hidden)))
        self.b2 = jnp.zeros((1, 1), jnp.float32)

        # Hoisted per-call work: decide D tiling once and cache the zero-padded,
        # bf16, lane-dense weight.  This removes a full extra HBM read+write of W1
        # from every forward call.
        self.D_pad, self.tk = _choose_d_tiling(in_features, hidden)
        w1_p = jnp.zeros((hidden, self.D_pad), jnp.float32).at[:, :in_features].set(self.w1_t)
        self.w1_bf16 = jax.block_until_ready(w1_p.astype(jnp.bfloat16))

        # TODO(synk): spectral_norm power-iteration normalization of the weights is a
        # training-time parametrization; not reproduced here.

    def __call__(self, x):
        # x: [B, C, H, W] (NCHW). Flatten in PyTorch .view(B, -1) order.
        B = x.shape[0]
        x_flat = x.reshape(B, -1)
        return _net_forward(x_flat, self.w1_bf16, self.b1, self.w2_row, self.b2,
                            tk=self.tk)


if __name__ == "__main__":
    key = jax.random.PRNGKey(0)
    k_x, k_net = jax.random.split(key)

    B, C, H, W = 2, 4, 16, 16
    hidden = 32
    x = jax.random.normal(k_x, (B, C, H, W), jnp.float32)

    net = SimpleDistanceDiscriminator(in_features=C * H * W, hidden=hidden, key=k_net)
    model = DDP(net)

    # Exercise the PackedTensor-unwrapping path of DDP.forward.
    out = model(PackedTensor(x))
    out = jax.block_until_ready(out)
    assert out.shape == (B, 1)

    # Plain-JAX reference using the same bf16 input rounding the kernel applies.
    x_flat = x.reshape(B, -1)
    xb = x_flat.astype(jnp.bfloat16).astype(jnp.float32)
    wb = net.w1_t.astype(jnp.bfloat16).astype(jnp.float32)
    h_ref = xb @ wb.T + net.b1
    h_ref = jnp.where(h_ref > 0, h_ref, 0.2 * h_ref)
    ref = jnp.sum(h_ref * net.w2_row, axis=-1, keepdims=True) + net.b2

    assert jnp.allclose(out, ref, atol=1e-2, rtol=1e-2)

    print("KERNEL_OK")
</pallas_src>

<mosaic_0001>
module attributes {stable_mosaic.version = 11 : i64} {
  func.func @_ddp_net_kernel_single(%arg0: i32, %arg1: memref<16x1024xbf16, #tpu.memory_space<vmem>>, %arg2: memref<32x1024xbf16, #tpu.memory_space<vmem>>, %arg3: memref<1x32xf32, #tpu.memory_space<vmem>>, %arg4: memref<1x32xf32, #tpu.memory_space<vmem>>, %arg5: memref<1x1xf32, #tpu.memory_space<vmem>>, %arg6: memref<16x128xf32, #tpu.memory_space<vmem>>) attributes {dimension_semantics = [#tpu.dimension_semantics<parallel>], iteration_bounds = array<i64: 1>, scalar_prefetch = 0 : i64, scratch_operands = 0 : i64, tpu.core_type = #tpu.core_type<tc>, window_params = [{transform_indices = @transform_0, window_bounds = array<i64: 16, 1024>}, {pipeline_mode = #tpu.pipeline_mode<synchronous>, transform_indices = @transform_1, window_bounds = array<i64: 32, 1024>}, {pipeline_mode = #tpu.pipeline_mode<synchronous>, transform_indices = @transform_2, window_bounds = array<i64: 1, 32>}, {pipeline_mode = #tpu.pipeline_mode<synchronous>, transform_indices = @transform_3, window_bounds = array<i64: 1, 32>}, {pipeline_mode = #tpu.pipeline_mode<synchronous>, transform_indices = @transform_4, window_bounds = array<i64: 1, 1>}, {transform_indices = @transform_5, window_bounds = array<i64: 16, 128>}]} {
    %c0 = arith.constant 0 : index
    %c0_0 = arith.constant 0 : index
    %0 = vector.load %arg1[%c0, %c0_0] : memref<16x1024xbf16, #tpu.memory_space<vmem>>, vector<16x1024xbf16>
    %c0_1 = arith.constant 0 : index
    %c0_2 = arith.constant 0 : index
    %1 = vector.load %arg2[%c0_1, %c0_2] : memref<32x1024xbf16, #tpu.memory_space<vmem>>, vector<32x1024xbf16>
    %cst = arith.constant dense<0.000000e+00> : vector<16x32xf32>
    %2 = tpu.matmul %0, %1, %cst {dimension_numbers = #tpu.dot_dimension_numbers<[1], [1], [0], [0], [0, 0, 1, 0], [], []>} : vector<16x1024xbf16>, vector<32x1024xbf16>, vector<16x32xf32> -> vector<16x32xf32>
    %c0_3 = arith.constant 0 : index
    %c0_4 = arith.constant 0 : index
    %3 = vector.load %arg3[%c0_3, %c0_4] : memref<1x32xf32, #tpu.memory_space<vmem>>, vector<1x32xf32>
    %c0_5 = arith.constant 0 : index
    %c0_6 = arith.constant 0 : index
    %4 = vector.load %arg4[%c0_5, %c0_6] : memref<1x32xf32, #tpu.memory_space<vmem>>, vector<1x32xf32>
    %c0_7 = arith.constant 0 : index
    %c0_8 = arith.constant 0 : index
    %5 = vector.load %arg5[%c0_7, %c0_8] : memref<1x1xf32, #tpu.memory_space<vmem>>, vector<1x1xf32>
    %6 = vector.broadcast %3 : vector<1x32xf32> to vector<16x32xf32>
    %7 = arith.addf %2, %6 : vector<16x32xf32>
    %cst_9 = arith.constant 0.000000e+00 : f32
    %8 = vector.broadcast %cst_9 : f32 to vector<16x32xf32>
    %9 = arith.cmpf ogt, %7, %8 : vector<16x32xf32>
    %cst_10 = arith.constant 2.000000e-01 : f32
    %10 = vector.broadcast %cst_10 : f32 to vector<16x32xf32>
    %11 = arith.mulf %10, %7 : vector<16x32xf32>
    %12 = arith.select %9, %7, %11 : vector<16x32xi1>, vector<16x32xf32>
    %13 = vector.broadcast %4 : vector<1x32xf32> to vector<16x32xf32>
    %14 = arith.mulf %12, %13 : vector<16x32xf32>
    %cst_11 = arith.constant dense<0.000000e+00> : vector<16xf32>
    %15 = vector.multi_reduction <add>, %14, %cst_11 [1] : vector<16x32xf32> to vector<16xf32>
    %16 = vector.shape_cast %15 : vector<16xf32> to vector<16x1xf32>
    %17 = vector.broadcast %5 : vector<1x1xf32> to vector<16x1xf32>
    %18 = arith.addf %16, %17 : vector<16x1xf32>
    %19 = vector.shape_cast %18 : vector<16x1xf32> to vector<16x1xf32>
    %20 = vector.broadcast %19 : vector<16x1xf32> to vector<16x128xf32>
    %c0_12 = arith.constant 0 : index
    %c0_13 = arith.constant 0 : index
    %21 = vector.load %arg6[%c0_12, %c0_13] : memref<16x128xf32, #tpu.memory_space<vmem>>, vector<16x128xf32>
    tpu.vector_store %arg6[%c0_12, %c0_13], %20 {strides = array<i32>} : memref<16x128xf32, #tpu.memory_space<vmem>>, vector<16x128xf32>,
    return
  }
  func.func @transform_0(%arg0: i32) -> (i32, i32) {
    %c0_i32 = arith.constant 0 : i32
    %c0_i32_0 = arith.constant 0 : i32
    return %arg0, %c0_i32 : i32, i32
  }
  func.func @transform_1(%arg0: i32) -> (i32, i32) {
    %c0_i32 = arith.constant 0 : i32
    %c0_i32_0 = arith.constant 0 : i32
    %c0_i32_1 = arith.constant 0 : i32
    return %c0_i32, %c0_i32_0 : i32, i32
  }
  func.func @transform_2(%arg0: i32) -> (i32, i32) {
    %c0_i32 = arith.constant 0 : i32
    %c0_i32_0 = arith.constant 0 : i32
    %c0_i32_1 = arith.constant 0 : i32
    return %c0_i32, %c0_i32_0 : i32, i32
  }
  func.func @transform_3(%arg0: i32) -> (i32, i32) {
    %c0_i32 = arith.constant 0 : i32
    %c0_i32_0 = arith.constant 0 : i32
    %c0_i32_1 = arith.constant 0 : i32
    return %c0_i32, %c0_i32_0 : i32, i32
  }
  func.func @transform_4(%arg0: i32) -> (i32, i32) {
    %c0_i32 = arith.constant 0 : i32
    %c0_i32_0 = arith.constant 0 : i32
    %c0_i32_1 = arith.constant 0 : i32
    return %c0_i32, %c0_i32_0 : i32, i32
  }
  func.func @transform_5(%arg0: i32) -> (i32, i32) {
    %c0_i32 = arith.constant 0 : i32
    %c0_i32_0 = arith.constant 0 : i32
    return %arg0, %c0_i32 : i32, i32
  }
}

</mosaic_0001>

<llo_original>
// kernel: tpu_custom_call.1
$region0: #{tpu_custom_call.1}
  #allocation0 [shape = 'u32[]', space=smem, size = 0x4, offset = 0x4, fixed_abs, tag = 'smem constant byte address 0x4 - core index']
  #allocation1 [shape = 'u32[144,128]{1,0:T(1,128)}', space=vmem, size = 0x12000, scoped, tag = 'internal scratch']
  #allocation2 [shape = 'f32[1,1]{1,0:T(1,128)S(1)}', space=vmem, size = 0x200, scoped, tag = 'scoped memory for tpu_custom_call.1']
  %s0 = inlined_call_operand.hbm [shape: bf16[16,1024], index: 0, kind: input, shape index: {}]
  %s1 = inlined_call_operand.hbm [shape: bf16[32,1024], index: 1, kind: input, shape index: {}]
  %s2 = inlined_call_operand.vmem [shape: f32[1,32], index: 2, kind: input, shape index: {}]
  %s3 = inlined_call_operand.vmem [shape: f32[1,32], index: 3, kind: input, shape index: {}]
  %s4 = inlined_call_operand.<no memory space> [shape: f32[1,1], index: 4, kind: input, shape index: {}]
  %s5 = inlined_call_operand.hbm [shape: f32[16,128], index: 5, kind: output, shape index: {}]
  %s6 = sld [smem:[#allocation0]]
  $region38: #{tpu_custom_call.1} parent=0
    _
  %s8 = ssub.s32 1, %s6
  %s9 = scalar_select 0, %s8, %s6
  %v10 = vstv %s4
  %11 = vst [vmem:[#allocation2] sm:$0x1] %v10
  $region1: #{tpu_custom_call.1} parent=0
    #allocation3 [shape = 'u8[32768]{0}', space=vmem, size = 0x8000, scoped, tag = 'input window, operand 0, single buffered']
    #allocation4 [shape = 's32[1]{0}', space=sflag, size = 0x4, scoped, tag = 'scoped memory for tpu_custom_call.1']
    #allocation5 [shape = 's32[1]{0}', space=sflag, size = 0x4, scoped, tag = 'scoped memory for tpu_custom_call.1']
    #allocation6 [shape = 'u8[65536]{0}', space=vmem, size = 0x10000, scoped, tag = 'input window, operand 1, single buffered']
    #allocation7 [shape = 's32[1]{0}', space=sflag, size = 0x4, scoped, tag = 'scoped memory for tpu_custom_call.1']
    #allocation8 [shape = 'u8[8192]{0}', space=vmem, size = 0x2000, scoped, tag = 'output window, operand 0, single buffered']
    %12 = vsyncpa [#allocation4], 0
    %13 = vsyncpa [#allocation7], 0
    %14 = vsyncpa [#allocation5], 0
    // Predicated region
    $region2: #{tpu_custom_call.1} parent=1 // pred_check
      _
    $region3: #{tpu_custom_call.1} parent=1 // pred_check_branch
      %16 = sbr.rel (0) target = $region5
    $region4: #{tpu_custom_call.1} parent=1 // pred_region
      %s18 = ssub.s32 1024, 1024
      %19 = vsyncadd [#allocation4], %s18
      %s20 = sshll.u32 [#allocation3], 4
      %s21 = int_to_ptr.vmem [resolvable:$true] %s20
      %26 = dma.hbm_to_vmem [thread:$0]  %s0, 1024, %s21, [#allocation4], 512, 512, 32
    $region5: #{tpu_custom_call.1} parent=1 // pred_fallthru
      _
    // Predicated region
    $region6: #{tpu_custom_call.1} parent=1 // pred_check
      _
    $region7: #{tpu_custom_call.1} parent=1 // pred_check_branch
      %28 = sbr.rel (0) target = $region9
    $region8: #{tpu_custom_call.1} parent=1 // pred_region
      %s30 = ssub.s32 2048, 2048
      %31 = vsyncadd [#allocation7], %s30
      %s32 = sshll.u32 [#allocation6], 4
      %s33 = int_to_ptr.vmem [resolvable:$true] %s32
      %38 = dma.hbm_to_vmem [thread:$0]  %s1, 2048, %s33, [#allocation7], 512, 512, 32
    $region9: #{tpu_custom_call.1} parent=1 // pred_fallthru
      _
    // Predicated region
    $region10: #{tpu_custom_call.1} parent=1 // pred_check
      _
    $region11: #{tpu_custom_call.1} parent=1 // pred_check_branch
      %40 = sbr.rel (0) target = $region13
    $region12: #{tpu_custom_call.1} parent=1 // pred_region
      _
    $region13: #{tpu_custom_call.1} parent=1 // pred_fallthru
      _
    // Predicated region
    $region14: #{tpu_custom_call.1} parent=1 // pred_check
      _
    $region15: #{tpu_custom_call.1} parent=1 // pred_check_branch
      %42 = sbr.rel (0) target = $region17
    $region16: #{tpu_custom_call.1} parent=1 // pred_region
      _
    $region17: #{tpu_custom_call.1} parent=1 // pred_fallthru
      _
    // Predicated region
    $region18: #{tpu_custom_call.1} parent=1 // pred_check
      _
    $region19: #{tpu_custom_call.1} parent=1 // pred_check_branch
      %44 = sbr.rel (0) target = $region21
    $region20: #{tpu_custom_call.1} parent=1 // pred_region
      _
    $region21: #{tpu_custom_call.1} parent=1 // pred_fallthru
      _
    // Predicated region
    $region22: #{tpu_custom_call.1} parent=1 // pred_check
      _
    $region23: #{tpu_custom_call.1} parent=1 // pred_check_branch
      %46 = sbr.rel (0) target = $region25
    $region24: #{tpu_custom_call.1} parent=1 // pred_region
      %47 = dma.done [#allocation4], 1024
    $region25: #{tpu_custom_call.1} parent=1 // pred_fallthru
      _
    // Predicated region
    $region26: #{tpu_custom_call.1} parent=1 // pred_check
      _
    $region27: #{tpu_custom_call.1} parent=1 // pred_check_branch
      %49 = sbr.rel (0) target = $region29
    $region28: #{tpu_custom_call.1} parent=1 // pred_region
      %50 = dma.done [#allocation7], 2048
    $region29: #{tpu_custom_call.1} parent=1 // pred_fallthru
      _
    %v52 = vld [vmem:[#allocation3] sm:$0xff]
    %v53 = vld [vmem:[#allocation3 + $0x8] sm:$0xff]
    %v54 = vld [vmem:[#allocation3 + $0x10] sm:$0xff]
    %v55 = vld [vmem:[#allocation3 + $0x18] sm:$0xff]
    %v56 = vld [vmem:[#allocation3 + $0x20] sm:$0xff]
    %v57 = vld [vmem:[#allocation3 + $0x28] sm:$0xff]
    %v58 = vld [vmem:[#allocation3 + $0x30] sm:$0xff]
    %v59 = vld [vmem:[#allocation3 + $0x38] sm:$0xff]
    %v60 = vld [vmem:[#allocation6] sm:$0xff]
    %v61 = vld [vmem:[#allocation6 + $0x8] sm:$0xff]
    %v62 = vld [vmem:[#allocation6 + $0x10] sm:$0xff]
    %v63 = vld [vmem:[#allocation6 + $0x18] sm:$0xff]
    %v64 = vld [vmem:[#allocation6 + $0x20] sm:$0xff]
    %v65 = vld [vmem:[#allocation6 + $0x28] sm:$0xff]
    %v66 = vld [vmem:[#allocation6 + $0x30] sm:$0xff]
    %v67 = vld [vmem:[#allocation6 + $0x38] sm:$0xff]
    %v68 = vld [vmem:[#allocation6 + $0x40] sm:$0xff]
    %v69 = vld [vmem:[#allocation6 + $0x48] sm:$0xff]
    %v70 = vld [vmem:[#allocation6 + $0x50] sm:$0xff]
    %v71 = vld [vmem:[#allocation6 + $0x58] sm:$0xff]
    %v72 = vld [vmem:[#allocation6 + $0x60] sm:$0xff]
    %v73 = vld [vmem:[#allocation6 + $0x68] sm:$0xff]
    %v74 = vld [vmem:[#allocation6 + $0x70] sm:$0xff]
    %v75 = vld [vmem:[#allocation6 + $0x78] sm:$0xff]
    %v76 = vld [vmem:[%s2] sm:$0x1]
    %v77 = vld [vmem:[%s3] sm:$0x1]
    %v78 = vld [vmem:[#allocation2] sm:$0x1]
    %v80 = vlaneseq
    %v81 = vshrl.u32 %v80, 7
    %v82 = vsub.s32 0, %v81
    %v83 = vrot.slane %v76, %v82
    %v93 = vunpack.c.l.b16 %v52
    %v94 = vunpack.c.h.b16 %v52
    %v95 = vunpack.c.l.b16 %v53
    %v96 = vunpack.c.h.b16 %v53
    %v97 = vunpack.c.l.b16 %v54
    %v98 = vunpack.c.h.b16 %v54
    %v99 = vunpack.c.l.b16 %v55
    %v100 = vunpack.c.h.b16 %v55
    %v101 = vunpack.c.l.b16 %v56
    %v102 = vunpack.c.h.b16 %v56
    %v103 = vunpack.c.l.b16 %v57
    %v104 = vunpack.c.h.b16 %v57
    %v105 = vunpack.c.l.b16 %v58
    %v106 = vunpack.c.h.b16 %v58
    %v107 = vunpack.c.l.b16 %v59
    %v108 = vunpack.c.h.b16 %v59
    %v109 = vpack.c.b16 %v101, %v93
    %v110 = vpack.c.b16 %v102, %v94
    %v111 = vpack.c.b16 %v103, %v95
    %v112 = vpack.c.b16 %v104, %v96
    %v113 = vpack.c.b16 %v105, %v97
    %v114 = vpack.c.b16 %v106, %v98
    %v115 = vpack.c.b16 %v107, %v99
    %v116 = vpack.c.b16 %v108, %v100
    %v141 = vunpack.c.l.b16 %v60
    %v142 = vunpack.c.h.b16 %v60
    %v143 = vunpack.c.l.b16 %v61
    %v144 = vunpack.c.h.b16 %v61
    %v145 = vunpack.c.l.b16 %v62
    %v146 = vunpack.c.h.b16 %v62
    %v147 = vunpack.c.l.b16 %v63
    %v148 = vunpack.c.h.b16 %v63
    %v149 = vunpack.c.l.b16 %v64
    %v150 = vunpack.c.h.b16 %v64
    %v151 = vunpack.c.l.b16 %v65
    %v152 = vunpack.c.h.b16 %v65
    %v153 = vunpack.c.l.b16 %v66
    %v154 = vunpack.c.h.b16 %v66
    %v155 = vunpack.c.l.b16 %v67
    %v156 = vunpack.c.h.b16 %v67
    %v157 = vunpack.c.l.b16 %v68
    %v158 = vunpack.c.h.b16 %v68
    %v159 = vunpack.c.l.b16 %v69
    %v160 = vunpack.c.h.b16 %v69
    %v161 = vunpack.c.l.b16 %v70
    %v162 = vunpack.c.h.b16 %v70
    %v163 = vunpack.c.l.b16 %v71
    %v164 = vunpack.c.h.b16 %v71
    %v165 = vunpack.c.l.b16 %v72
    %v166 = vunpack.c.h.b16 %v72
    %v167 = vunpack.c.l.b16 %v73
    %v168 = vunpack.c.h.b16 %v73
    %v169 = vunpack.c.l.b16 %v74
    %v170 = vunpack.c.h.b16 %v74
    %v171 = vunpack.c.l.b16 %v75
    %v172 = vunpack.c.h.b16 %v75
    %v173 = vpack.c.b16 %v149, %v141
    %v174 = vpack.c.b16 %v150, %v142
    %v175 = vpack.c.b16 %v151, %v143
    %v176 = vpack.c.b16 %v152, %v144
    %v177 = vpack.c.b16 %v153, %v145
    %v178 = vpack.c.b16 %v154, %v146
    %v179 = vpack.c.b16 %v155, %v147
    %v180 = vpack.c.b16 %v156, %v148
    %v181 = vpack.c.b16 %v165, %v157
    %v182 = vpack.c.b16 %v166, %v158
    %v183 = vpack.c.b16 %v167, %v159
    %v184 = vpack.c.b16 %v168, %v160
    %v185 = vpack.c.b16 %v169, %v161
    %v186 = vpack.c.b16 %v170, %v162
    %v187 = vpack.c.b16 %v171, %v163
    %v188 = vpack.c.b16 %v172, %v164
    %205 = vmatprep.subr.bf16.mxu0 0
    %206 = vmatpush1.bf16.xpose.msra.mxu0 0
    %207 = vmatprep.subr.bf16.mxu0 0
    %208 = vmatpush1.bf16.xpose.msra.mxu0 0
    %209 = vmatprep.subr.bf16.mxu0 0
    %210 = vmatpush1.bf16.xpose.msra.mxu0 0
    %211 = vmatprep.subr.bf16.mxu0 0
    %212 = vmatpush1.bf16.xpose.msra.mxu0 0
    %213 = vmatprep.subr.bf16.mxu0 0
    %214 = vmatpush1.bf16.xpose.msra.mxu0 0
    %215 = vmatprep.subr.bf16.mxu0 0
    %216 = vmatpush1.bf16.xpose.msra.mxu0 0
    %217 = vmatprep.subr.bf16.mxu0 %v182
    %218 = vmatpush1.bf16.xpose.msra.mxu0 %v181
    %219 = vmatprep.subr.bf16.mxu0 %v174
    %220 = vmatpush1.bf16.xpose.msra.mxu0 %v173
    %221 = vmatprep.subr.bf16.mxu0 0
    %222 = vmatpush2.bf16.xpose.msra.mxu0 0
    %223 = vmatprep.subr.bf16.mxu0 0
    %224 = vmatpush2.bf16.xpose.msra.mxu0 0
    %225 = vmatprep.subr.bf16.mxu0 0
    %226 = vmatpush2.bf16.xpose.msra.mxu0 0
    %227 = vmatprep.subr.bf16.mxu0 0
    %228 = vmatpush2.bf16.xpose.msra.mxu0 0
    %229 = vmatprep.subr.bf16.mxu0 0
    %230 = vmatpush2.bf16.xpose.msra.mxu0 0
    %231 = vmatprep.subr.bf16.mxu0 0
    %232 = vmatpush2.bf16.xpose.msra.mxu0 0
    %233 = vmatprep.subr.bf16.mxu0 0
    %234 = vmatpush2.bf16.xpose.msra.mxu0 0
    %235 = vmatprep.subr.bf16.mxu0 0
    %236 = vmatpush2.bf16.xpose.msra.mxu0 0
    %237 = vmatprep.mubr.bf16.mxu0 %v110
    %238 = vmatmul.mubr.bf16.gmra.mxu0 %v109
    %v239 = vpop.f32.mrf.mxu0
    %v240 = vadd.f32 %v83, %v239
    %v241 = vpop.f32.mrf.mxu0
    %v242 = vpop.f32.mrf.mxu0
    %v243 = vadd.f32 %v83, %v242
    %v244 = vpop.f32.mrf.mxu0
    %245 = vdwg.mxu0
    %246 = vmatprep.subr.bf16.mxu0 0
    %247 = vmatpush1.bf16.xpose.msra.mxu0 0
    %248 = vmatprep.subr.bf16.mxu0 0
    %249 = vmatpush1.bf16.xpose.msra.mxu0 0
    %250 = vmatprep.subr.bf16.mxu0 0
    %251 = vmatpush1.bf16.xpose.msra.mxu0 0
    %252 = vmatprep.subr.bf16.mxu0 0
    %253 = vmatpush1.bf16.xpose.msra.mxu0 0
    %254 = vmatprep.subr.bf16.mxu0 0
    %255 = vmatpush1.bf16.xpose.msra.mxu0 0
    %256 = vmatprep.subr.bf16.mxu0 0
    %257 = vmatpush1.bf16.xpose.msra.mxu0 0
    %258 = vmatprep.subr.bf16.mxu0 %v184
    %259 = vmatpush1.bf16.xpose.msra.mxu0 %v183
    %260 = vmatprep.subr.bf16.mxu0 %v176
    %261 = vmatpush1.bf16.xpose.msra.mxu0 %v175
    %262 = vmatprep.subr.bf16.mxu0 0
    %263 = vmatpush2.bf16.xpose.msra.mxu0 0
    %264 = vmatprep.subr.bf16.mxu0 0
    %265 = vmatpush2.bf16.xpose.msra.mxu0 0
    %266 = vmatprep.subr.bf16.mxu0 0
    %267 = vmatpush2.bf16.xpose.msra.mxu0 0
    %268 = vmatprep.subr.bf16.mxu0 0
    %269 = vmatpush2.bf16.xpose.msra.mxu0 0
    %270 = vmatprep.subr.bf16.mxu0 0
    %271 = vmatpush2.bf16.xpose.msra.mxu0 0
    %272 = vmatprep.subr.bf16.mxu0 0
    %273 = vmatpush2.bf16.xpose.msra.mxu0 0
    %274 = vmatprep.subr.bf16.mxu0 0
    %275 = vmatpush2.bf16.xpose.msra.mxu0 0
    %276 = vmatprep.subr.bf16.mxu0 0
    %277 = vmatpush2.bf16.xpose.msra.mxu0 0
    %278 = vmatprep.mubr.bf16.mxu0 %v112
    %279 = vmatmul.mubr.bf16.gmra.mxu0 %v111
    %v280 = vpop.f32.mrf.mxu0
    %v281 = vadd.f32 %v240, %v280
    %v282 = vpop.f32.mrf.mxu0
    %v283 = vpop.f32.mrf.mxu0
    %v284 = vadd.f32 %v243, %v283
    %v285 = vpop.f32.mrf.mxu0
    %286 = vdwg.mxu0
    %287 = vmatprep.subr.bf16.mxu0 0
    %288 = vmatpush1.bf16.xpose.msra.mxu0 0
    %289 = vmatprep.subr.bf16.mxu0 0
    %290 = vmatpush1.bf16.xpose.msra.mxu0 0
    %291 = vmatprep.subr.bf16.mxu0 0
    %292 = vmatpush1.bf16.xpose.msra.mxu0 0
    %293 = vmatprep.subr.bf16.mxu0 0
    %294 = vmatpush1.bf16.xpose.msra.mxu0 0
    %295 = vmatprep.subr.bf16.mxu0 0
    %296 = vmatpush1.bf16.xpose.msra.mxu0 0
    %297 = vmatprep.subr.bf16.mxu0 0
    %298 = vmatpush1.bf16.xpose.msra.mxu0 0
    %299 = vmatprep.subr.bf16.mxu0 %v186
    %300 = vmatpush1.bf16.xpose.msra.mxu0 %v185
    %301 = vmatprep.subr.bf16.mxu0 %v178
    %302 = vmatpush1.bf16.xpose.msra.mxu0 %v177
    %303 = vmatprep.subr.bf16.mxu0 0
    %304 = vmatpush2.bf16.xpose.msra.mxu0 0
    %305 = vmatprep.subr.bf16.mxu0 0
    %306 = vmatpush2.bf16.xpose.msra.mxu0 0
    %307 = vmatprep.subr.bf16.mxu0 0
    %308 = vmatpush2.bf16.xpose.msra.mxu0 0
    %309 = vmatprep.subr.bf16.mxu0 0
    %310 = vmatpush2.bf16.xpose.msra.mxu0 0
    %311 = vmatprep.subr.bf16.mxu0 0
    %312 = vmatpush2.bf16.xpose.msra.mxu0 0
    %313 = vmatprep.subr.bf16.mxu0 0
    %314 = vmatpush2.bf16.xpose.msra.mxu0 0
    %315 = vmatprep.subr.bf16.mxu0 0
    %316 = vmatpush2.bf16.xpose.msra.mxu0 0
    %317 = vmatprep.subr.bf16.mxu0 0
    %318 = vmatpush2.bf16.xpose.msra.mxu0 0
    %319 = vmatprep.mubr.bf16.mxu0 %v114
    %320 = vmatmul.mubr.bf16.gmra.mxu0 %v113
    %v321 = vpop.f32.mrf.mxu0
    %v322 = vadd.f32 %v281, %v321
    %v323 = vpop.f32.mrf.mxu0
    %v324 = vpop.f32.mrf.mxu0
    %v325 = vadd.f32 %v284, %v324
    %v326 = vpop.f32.mrf.mxu0
    %327 = vdwg.mxu0
    %328 = vmatprep.subr.bf16.mxu0 0
    %329 = vmatpush1.bf16.xpose.msra.mxu0 0
    %330 = vmatprep.subr.bf16.mxu0 0
    %331 = vmatpush1.bf16.xpose.msra.mxu0 0
    %332 = vmatprep.subr.bf16.mxu0 0
    %333 = vmatpush1.bf16.xpose.msra.mxu0 0
    %334 = vmatprep.subr.bf16.mxu0 0
    %335 = vmatpush1.bf16.xpose.msra.mxu0 0
    %336 = vmatprep.subr.bf16.mxu0 0
    %337 = vmatpush1.bf16.xpose.msra.mxu0 0
    %338 = vmatprep.subr.bf16.mxu0 0
    %339 = vmatpush1.bf16.xpose.msra.mxu0 0
    %340 = vmatprep.subr.bf16.mxu0 %v188
    %341 = vmatpush1.bf16.xpose.msra.mxu0 %v187
    %342 = vmatprep.subr.bf16.mxu0 %v180
    %343 = vmatpush1.bf16.xpose.msra.mxu0 %v179
    %344 = vmatprep.subr.bf16.mxu0 0
    %345 = vmatpush2.bf16.xpose.msra.mxu0 0
    %346 = vmatprep.subr.bf16.mxu0 0
    %347 = vmatpush2.bf16.xpose.msra.mxu0 0
    %348 = vmatprep.subr.bf16.mxu0 0
    %349 = vmatpush2.bf16.xpose.msra.mxu0 0
    %350 = vmatprep.subr.bf16.mxu0 0
    %351 = vmatpush2.bf16.xpose.msra.mxu0 0
    %352 = vmatprep.subr.bf16.mxu0 0
    %353 = vmatpush2.bf16.xpose.msra.mxu0 0
    %354 = vmatprep.subr.bf16.mxu0 0
    %355 = vmatpush2.bf16.xpose.msra.mxu0 0
    %356 = vmatprep.subr.bf16.mxu0 0
    %357 = vmatpush2.bf16.xpose.msra.mxu0 0
    %358 = vmatprep.subr.bf16.mxu0 0
    %359 = vmatpush2.bf16.xpose.msra.mxu0 0
    %360 = vmatprep.mubr.bf16.mxu0 %v116
    %361 = vmatmul.mubr.bf16.gmra.mxu0 %v115
    %v362 = vpop.f32.mrf.mxu0
    %v363 = vadd.f32 %v322, %v362
    %v364 = vpop.f32.mrf.mxu0
    %v365 = vpop.f32.mrf.mxu0
    %v366 = vadd.f32 %v325, %v365
    %v367 = vpop.f32.mrf.mxu0
    %368 = vdwg.mxu0
    %vm369 = vcmp.gt.f32.partialorder %v363, 0.0
    %vm370 = vcmp.gt.f32.partialorder %v366, 0.0
    %v371 = vmul.f32 %v363, 0.2
    %v372 = vmul.f32 %v366, 0.2
    %v373 = vsel %vm369, %v363, %v371
    %v374 = vsel %vm370, %v366, %v372
    %v376 = vlaneseq
    %v377 = vshrl.u32 %v376, 7
    %v378 = vsub.s32 0, %v377
    %v379 = vrot.slane %v77, %v378
    %v381 = vmul.f32 %v373, %v379
    %v382 = vmul.f32 %v374, %v379
    %vm383 = vcmask 261120
    %v384 = vsel %vm383, %v381, 0.0
    %385 = vadd.xlane.f32.xlu0 %v384
    %v386 = vpop.xlane.xlu0 %385
    %v387 = vsel %vm383, %v382, 0.0
    %388 = vadd.xlane.f32.xlu0 %v387
    %v389 = vpop.xlane.xlu0 %388
    %v391 = vlaneseq
    %v392 = vshrl.u32 %v391, 7
    %v393 = vsub.s32 0, %v392
    %v394 = vrot.slane %v78, %v393
    %v396 = vadd.f32 %v386, %v394
    %v397 = vadd.f32 %v389, %v394
    %399 = vset.pattern.permute.xlu0 0
    %400 = vperm.xlu0 %399, %v396
    %v401 = vpop.permute.xlu0 %400
    %404 = vset.pattern.permute.xlu0 0
    %405 = vperm.xlu0 %404, %v397
    %v406 = vpop.permute.xlu0 %405
    %408 = vst [vmem:[#allocation8] sm:$0xff] %v401
    %409 = vst [vmem:[#allocation8 + $0x8] sm:$0xff] %v406
    // Predicated region
    $region30: #{tpu_custom_call.1} parent=1 // pred_check
      _
    $region31: #{tpu_custom_call.1} parent=1 // pred_check_branch
      %411 = sbr.rel (0) target = $region33
    $region32: #{tpu_custom_call.1} parent=1 // pred_region
      %s413 = ssub.s32 256, 256
      %414 = vsyncadd [#allocation5], %s413
      %s415 = sshll.u32 [#allocation8], 4
      %s416 = int_to_ptr.vmem [resolvable:$true] %s415
      %421 = dma.vmem_to_hbm [thread:$0]  %s416, 256, %s5, [#allocation5], 128, 128, 8
    $region33: #{tpu_custom_call.1} parent=1 // pred_fallthru
      _
    // Predicated region
    $region34: #{tpu_custom_call.1} parent=1 // pred_check
      _
    $region35: #{tpu_custom_call.1} parent=1 // pred_check_branch
      %423 = sbr.rel (0) target = $region37
    $region36: #{tpu_custom_call.1} parent=1 // pred_region
      %424 = dma.done [#allocation5], 256
    $region37: #{tpu_custom_call.1} parent=1 // pred_fallthru
      _
    %425 = vsyncpa [#allocation4], 1
    %426 = vsyncpa [#allocation7], 1
    %427 = vsyncpa [#allocation5], 1

</llo_original>
